<compile_context>
chip_gen: v7x
topology: tpu7x:2x2x1
jax: 0.10.0
libtpu: 0.0.40
codegen_flags: <defaults>
</compile_context>

<pallas_src>
import jax
import jax.numpy as jnp
from jax.experimental import pallas as pl
from jax.experimental.pallas import tpu as pltpu

_MIB = 1024 * 1024


def attention_kernel(x_ref, w_ref, o_ref):
    """Fused: linear score -> softmax over seq -> weighted sum over seq.

    x_ref: (TB, S, H) in VMEM (f32 or bf16)
    w_ref: (1, H)     in VMEM (torch Linear weight, kept f32)
    o_ref: (TB, 1, H) in VMEM
    """
    w = w_ref[...].astype(jnp.float32)                                  # (1, H)

    # --- score pass: Linear(H -> 1), bias omitted (cancels under softmax). ---
    # Lane reduction over H; keepdims so S stays in sublanes (no relayout later).
    # (If an XLU-bound profile ever shows up on v7x, this reduce can be moved to
    #  the idle MXU via a (TB*S, H) x (H, 1) dot with f32 accumulation.)
    scores = jnp.sum(x_ref[...].astype(jnp.float32) * w,
                     axis=-1, keepdims=True)                            # (TB, S, 1)

    # --- softmax over the sequence axis (torch dim=1): sublane reductions. ---
    m = jnp.max(scores, axis=1, keepdims=True)                          # (TB, 1, 1)
    e = jnp.exp(scores - m)                                             # (TB, S, 1)
    denom = jnp.sum(e, axis=1, keepdims=True)                           # (TB, 1, 1)

    # Approx reciprocal on the (otherwise idle) EUP + one Newton step on a
    # single tiny tensor -> negligible cost, f32-level accuracy.
    r = pl.reciprocal(denom, approx=True)
    r = r * (2.0 - denom * r)
    attn = e * r                                                        # (TB, S, 1)

    # --- weighted-sum pass: re-read x from VMEM (cheap, 3 vld/cycle) instead of
    # keeping a full-tile f32 copy live across both passes. ---
    out = jnp.sum(x_ref[...].astype(jnp.float32) * attn,
                  axis=1, keepdims=True)                                # (TB, 1, H)
    o_ref[...] = out.astype(o_ref.dtype)


def _vmem_capacity_bytes() -> int:
    """Physical VMEM per TensorCore; conservative fallback if the query fails."""
    try:
        info = pltpu.get_tpu_info()
        cap = getattr(info, "vmem_capacity_bytes", None)
        if cap:
            return int(cap)
    except Exception:
        pass
    return 64 * _MIB  # v7x per-TensorCore (smallest current generation)


def attention_module(gru_outputs, weight, bias=None, *, batch_block=None):
    """Pallas wrapper.

    gru_outputs: (B, S, H); weight: (1, H) torch Linear weight; bias: (1,)
    (accepted for API parity but unused: softmax shift-invariance makes the
    Linear bias a no-op for the returned weighted sum).
    Returns (B, H), matching the PyTorch module.
    """
    del bias  # mathematically cancels in softmax(scores) -> not sent to the kernel
    B, S, H = gru_outputs.shape
    x = gru_outputs
    w = weight.astype(jnp.float32)  # keep the Linear weight f32; only x is cast in-kernel

    # --- generation-aware VMEM budgeting. ---
    cap = _vmem_capacity_bytes()
    if cap >= 96 * _MIB:            # v5e / v6e: 128 MiB physical VMEM
        tile_budget = 24 * _MIB     # big tiles amortize the ~0.35us/step overhead
        vmem_limit = 96 * _MIB
    else:                           # v7x: 64 MiB per TensorCore
        tile_budget = 10 * _MIB
        vmem_limit = 48 * _MIB

    # Footprint per batch row: double-buffered input tile + transient f32 slabs
    # created inside the kernel (score pass / weighted-sum pass).
    in_row_bytes = S * H * x.dtype.itemsize
    f32_row_bytes = S * H * 4
    per_row = 2 * in_row_bytes + 2 * f32_row_bytes

    if batch_block is not None:
        TB = int(batch_block)
    else:
        TB = int(tile_budget // max(per_row, 1))
    TB = max(1, min(TB, B))

    # v7x megacore: guarantee >= 2 grid blocks so both TensorCores get work
    # (costs at most one extra tiny grid step on single-core chips).
    if B >= 2:
        TB = min(TB, pl.cdiv(B, 2))

    # If even the chosen tile exceeds the default limit, raise the limit rather
    # than silently overshooting; bail out clearly if one row can't fit at all.
    need = TB * per_row + 2 * _MIB
    if need > vmem_limit:
        vmem_limit = need
    if need > cap:
        # TODO(synk): seq-gridded online-softmax path for rows larger than VMEM.
        raise NotImplementedError(
            f"one batch row needs ~{need // _MIB} MiB VMEM (> {cap // _MIB} MiB); "
            "an 'arbitrary' seq grid axis with online softmax is required here")

    grid = (pl.cdiv(B, TB),)  # partial last block is masked; no batch padding

    out3 = pl.pallas_call(
        attention_kernel,
        out_shape=jax.ShapeDtypeStruct((B, 1, H), gru_outputs.dtype),
        grid=grid,
        in_specs=[
            # Full S and full H in the block -> no (8,128) padding needed, no
            # HBM inflation of x; only the batch axis is tiled.
            pl.BlockSpec((TB, S, H), lambda i: (i, 0, 0)),
            pl.BlockSpec((1, H), lambda i: (0, 0)),
        ],
        # (TB, 1, H) block: TB is a leading block dim (unconstrained), middle dim
        # equals the full dim 1, H equals the full dim -> legal for any TB >= 1.
        out_specs=pl.BlockSpec((TB, 1, H), lambda i: (i, 0, 0)),
        compiler_params=pltpu.CompilerParams(
            dimension_semantics=("parallel",),      # megacore-shard batch on v7x
            vmem_limit_bytes=int(vmem_limit),
        ),
    )(x, w)

    return out3[:, 0, :]


def reference(gru_outputs, weight, bias):
    scores = jnp.einsum("bsh,oh->bso", gru_outputs, weight) + bias   # (B, S, 1)
    attn = jax.nn.softmax(scores, axis=1)
    return jnp.sum(gru_outputs * attn, axis=1)


if __name__ == "__main__":
    B, S, H = 2, 8, 32  # batch, seq, gru_hidden_size

    key = jax.random.PRNGKey(0)
    kx, kw, kb = jax.random.split(key, 3)

    gru_outputs = jax.random.normal(kx, (B, S, H), dtype=jnp.float32)
    # Deterministic "Linear(gru_hidden_size, 1)" params: weight (1, H), bias (1,)
    bound = 1.0 / (H ** 0.5)
    weight = jax.random.uniform(kw, (1, H), jnp.float32, -bound, bound)
    bias = jax.random.uniform(kb, (1,), jnp.float32, -bound, bound)

    out = attention_module(gru_outputs, weight, bias)
    out = jax.block_until_ready(out)

    ref = reference(gru_outputs, weight, bias)
    assert out.shape == (B, H)
    assert jnp.allclose(out, ref, atol=1e-5, rtol=1e-5), (out, ref)

    print("KERNEL_OK")
</pallas_src>

<mosaic_0001>
module attributes {stable_mosaic.version = 11 : i64} {
  func.func @attention_kernel(%arg0: i32, %arg1: memref<1x8x32xf32, #tpu.memory_space<vmem>>, %arg2: memref<1x32xf32, #tpu.memory_space<vmem>>, %arg3: memref<1x1x32xf32, #tpu.memory_space<vmem>>) attributes {dimension_semantics = [#tpu.dimension_semantics<parallel>], iteration_bounds = array<i64: 2>, scalar_prefetch = 0 : i64, scratch_operands = 0 : i64, tpu.core_type = #tpu.core_type<tc>, window_params = [{transform_indices = @transform_0, window_bounds = array<i64: 1, 8, 32>}, {pipeline_mode = #tpu.pipeline_mode<synchronous>, transform_indices = @transform_1, window_bounds = array<i64: 1, 32>}, {transform_indices = @transform_2, window_bounds = array<i64: 1, 1, 32>}]} {
    %c0 = arith.constant 0 : index
    %c0_0 = arith.constant 0 : index
    %0 = vector.load %arg2[%c0, %c0_0] : memref<1x32xf32, #tpu.memory_space<vmem>>, vector<1x32xf32>
    %c0_1 = arith.constant 0 : index
    %c0_2 = arith.constant 0 : index
    %c0_3 = arith.constant 0 : index
    %1 = vector.load %arg1[%c0_1, %c0_2, %c0_3] : memref<1x8x32xf32, #tpu.memory_space<vmem>>, vector<1x8x32xf32>
    %2 = vector.shape_cast %0 : vector<1x32xf32> to vector<1x1x32xf32>
    %3 = vector.broadcast %2 : vector<1x1x32xf32> to vector<1x8x32xf32>
    %4 = arith.mulf %1, %3 : vector<1x8x32xf32>
    %cst = arith.constant dense<0.000000e+00> : vector<1x8xf32>
    %5 = vector.multi_reduction <add>, %4, %cst [2] : vector<1x8x32xf32> to vector<1x8xf32>
    %6 = vector.shape_cast %5 : vector<1x8xf32> to vector<1x8x1xf32>
    %cst_4 = arith.constant dense<0xFF800000> : vector<1x1xf32>
    %7 = vector.multi_reduction <maximumf>, %6, %cst_4 [1] : vector<1x8x1xf32> to vector<1x1xf32>
    %8 = vector.shape_cast %7 : vector<1x1xf32> to vector<1x1x1xf32>
    %9 = vector.broadcast %8 : vector<1x1x1xf32> to vector<1x8x1xf32>
    %10 = arith.subf %6, %9 : vector<1x8x1xf32>
    %11 = math.exp %10 : vector<1x8x1xf32>
    %cst_5 = arith.constant dense<0.000000e+00> : vector<1x1xf32>
    %12 = vector.multi_reduction <add>, %11, %cst_5 [1] : vector<1x8x1xf32> to vector<1x1xf32>
    %13 = vector.shape_cast %12 : vector<1x1xf32> to vector<1x1x1xf32>
    %14 = tpu.reciprocal %13 {approx = true} : vector<1x1x1xf32> -> vector<1x1x1xf32>
    %15 = arith.mulf %13, %14 : vector<1x1x1xf32>
    %cst_6 = arith.constant 2.000000e+00 : f32
    %16 = vector.broadcast %cst_6 : f32 to vector<1x1x1xf32>
    %17 = arith.subf %16, %15 : vector<1x1x1xf32>
    %18 = arith.mulf %14, %17 : vector<1x1x1xf32>
    %19 = vector.broadcast %18 : vector<1x1x1xf32> to vector<1x8x1xf32>
    %20 = arith.mulf %11, %19 : vector<1x8x1xf32>
    %c0_7 = arith.constant 0 : index
    %c0_8 = arith.constant 0 : index
    %c0_9 = arith.constant 0 : index
    %21 = vector.load %arg1[%c0_7, %c0_8, %c0_9] : memref<1x8x32xf32, #tpu.memory_space<vmem>>, vector<1x8x32xf32>
    %22 = vector.broadcast %20 : vector<1x8x1xf32> to vector<1x8x32xf32>
    %23 = arith.mulf %21, %22 : vector<1x8x32xf32>
    %cst_10 = arith.constant dense<0.000000e+00> : vector<1x32xf32>
    %24 = vector.multi_reduction <add>, %23, %cst_10 [1] : vector<1x8x32xf32> to vector<1x32xf32>
    %25 = vector.shape_cast %24 : vector<1x32xf32> to vector<1x1x32xf32>
    %c0_11 = arith.constant 0 : index
    %c0_12 = arith.constant 0 : index
    %c0_13 = arith.constant 0 : index
    %26 = vector.load %arg3[%c0_11, %c0_12, %c0_13] : memref<1x1x32xf32, #tpu.memory_space<vmem>>, vector<1x1x32xf32>
    tpu.vector_store %arg3[%c0_11, %c0_12, %c0_13], %25 {strides = array<i32>} : memref<1x1x32xf32, #tpu.memory_space<vmem>>, vector<1x1x32xf32>,
    return
  }
  func.func @transform_0(%arg0: i32) -> (i32, i32, i32) {
    %c0_i32 = arith.constant 0 : i32
    %c0_i32_0 = arith.constant 0 : i32
    %c0_i32_1 = arith.constant 0 : i32
    return %arg0, %c0_i32, %c0_i32_0 : i32, i32, i32
  }
  func.func @transform_1(%arg0: i32) -> (i32, i32) {
    %c0_i32 = arith.constant 0 : i32
    %c0_i32_0 = arith.constant 0 : i32
    %c0_i32_1 = arith.constant 0 : i32
    return %c0_i32, %c0_i32_0 : i32, i32
  }
  func.func @transform_2(%arg0: i32) -> (i32, i32, i32) {
    %c0_i32 = arith.constant 0 : i32
    %c0_i32_0 = arith.constant 0 : i32
    %c0_i32_1 = arith.constant 0 : i32
    return %arg0, %c0_i32, %c0_i32_0 : i32, i32, i32
  }
}

</mosaic_0001>

<llo_original>
// kernel: tpu_custom_call.1
$region0: #{tpu_custom_call.1}
  #allocation0 [shape = 'u32[]', space=smem, size = 0x4, offset = 0x4, fixed_abs, tag = 'smem constant byte address 0x4 - core index']
  #allocation1 [shape = 'u32[144,128]{1,0:T(1,128)}', space=vmem, size = 0x12000, scoped, tag = 'internal scratch']
  %s0 = inlined_call_operand.hbm [shape: f32[2,8,32], index: 0, kind: input, shape index: {}]
  %s1 = inlined_call_operand.vmem [shape: f32[1,32], index: 1, kind: input, shape index: {}]
  %s2 = inlined_call_operand.hbm [shape: f32[2,1,32], index: 2, kind: output, shape index: {}]
  %s3 = sld [smem:[#allocation0]]
  $region45: #{tpu_custom_call.1} parent=0
    _
  %s5 = ssub.s32 1, %s3
  %s6 = scalar_select 0, %s5, %s3
  $region1: #{tpu_custom_call.1} parent=0
    #allocation2 [shape = 'u8[8192]{0}', space=vmem, size = 0x2000, scoped, tag = 'input window, operand 0']
    #allocation3 [shape = 's32[2]{0}', space=sflag, size = 0x8, scoped, tag = 'scoped memory for tpu_custom_call.1']
    #allocation4 [shape = 's32[2]{0}', space=sflag, size = 0x8, scoped, tag = 'scoped memory for tpu_custom_call.1']
    #allocation5 [shape = 'u8[1024]{0}', space=vmem, size = 0x400, scoped, tag = 'output window, operand 0']
    %7 = vsyncpa [#allocation3], 0
    %s8 = scalar_lea.sflag [#allocation3], 1
    %9 = vsyncpa %s8, 0
    %10 = vsyncpa [#allocation4], 0
    %s11 = scalar_lea.sflag [#allocation4], 1
    %12 = vsyncpa %s11, 0
    loop: start=0, step=1, limit=4
    $region2: #{tpu_custom_call.1} parent=1 // loop_pre_header
      _
    $region3: #{tpu_custom_call.1} parent=1 // loop_header
      %s14 = sphi 0, %s18
      %p15 = scmp.ge.s32.totalorder %s14, 4
      %s24 = sphi 0, %s26
      %s27 = sphi 0, %s24
      %s28 = sphi 0, %s27
      %s44 = sphi 0, %s28
      %s48 = sphi 0, %s48
      %s50 = sphi 0, %s48
      %s51 = sphi 0, %s50
      %s65 = sphi 0, %s51
      %s71 = sphi 0, %s73
      %s74 = sphi 0, %s71
      %s75 = sphi 0, %s74
      %s91 = sphi 0, %s75
    $region4: #{tpu_custom_call.1} parent=1 // loop_header_branch
      %17 = sbr.rel (%p15) target = $region8
    $region5: #{tpu_custom_call.1} parent=1 // loop_body
      %s19 = ssub.s32 %s14, 1
      %s20 = ssub.s32 %s14, 2
      %s21 = sadd.s32 %s14, 1
      %s22 = ssub.s32 %s14, %s21
      %p23 = scmp.eq.s32.totalorder %s22, 0
      %s25 = sadd.s32 %s24, 1
      %s26 = scalar_select %p23, %s24, %s25
      %p29 = pneg %p23
      %p30 = scmp.eq.s32.totalorder %s14, 1
      %p31 = por %p29, %p30
      %p32 = scmp.ne.s32.totalorder %s24, %s27
      %p33 = scmp.eq.s32.totalorder %s14, 0
      %p34 = por %p32, %p33
      %p35 = scmp.ne.s32.totalorder %s24, %s27
      %p36 = scmp.eq.s32.totalorder %s19, 1
      %p37 = por %p35, %p36
      %p38 = scmp.ne.s32.totalorder %s27, %s28
      %p39 = scmp.eq.s32.totalorder %s19, 0
      %p40 = por %p38, %p39
      %p41 = scmp.ne.s32.totalorder %s27, %s28
      %p42 = scmp.eq.s32.totalorder %s20, 1
      %p43 = por %p41, %p42
      %p45 = scmp.ne.s32.totalorder %s28, %s44
      %p46 = scmp.eq.s32.totalorder %s20, 0
      %p47 = por %p45, %p46
      %s49 = sadd.s32 %s48, 1
      %p52 = scmp.eq.s32.totalorder %s14, 1
      %p53 = scmp.ne.s32.totalorder %s48, %s50
      %p54 = scmp.eq.s32.totalorder %s14, 0
      %p55 = por %p53, %p54
      %p56 = scmp.ne.s32.totalorder %s48, %s50
      %p57 = scmp.eq.s32.totalorder %s19, 1
      %p58 = por %p56, %p57
      %p59 = scmp.ne.s32.totalorder %s50, %s51
      %p60 = scmp.eq.s32.totalorder %s19, 0
      %p61 = por %p59, %p60
      %p62 = scmp.ne.s32.totalorder %s50, %s51
      %p63 = scmp.eq.s32.totalorder %s20, 1
      %p64 = por %p62, %p63
      %p66 = scmp.ne.s32.totalorder %s51, %s65
      %p67 = scmp.eq.s32.totalorder %s20, 0
      %p68 = por %p66, %p67
      %s69 = ssub.s32 %s14, %s21
      %p70 = scmp.eq.s32.totalorder %s69, 0
      %s72 = sadd.s32 %s71, 1
      %s73 = scalar_select %p70, %s71, %s72
      %p76 = pneg %p70
      %p77 = scmp.eq.s32.totalorder %s14, 1
      %p78 = por %p76, %p77
      %p79 = scmp.ne.s32.totalorder %s71, %s74
      %p80 = scmp.eq.s32.totalorder %s14, 0
      %p81 = por %p79, %p80
      %p82 = scmp.ne.s32.totalorder %s71, %s74
      %p83 = scmp.eq.s32.totalorder %s19, 1
      %p84 = por %p82, %p83
      %p85 = scmp.ne.s32.totalorder %s74, %s75
      %p86 = scmp.eq.s32.totalorder %s19, 0
      %p87 = por %p85, %p86
      %p88 = scmp.ne.s32.totalorder %s74, %s75
      %p89 = scmp.eq.s32.totalorder %s20, 1
      %p90 = por %p88, %p89
      %p92 = scmp.ne.s32.totalorder %s75, %s91
      %p93 = scmp.eq.s32.totalorder %s20, 0
      %p94 = por %p92, %p93
      %p95 = scmp.le.s32.totalorder 1, %s14
      %p96 = scmp.lt.s32.totalorder %s14, 3
      %p97 = pnand %p95, %p96
      %p98 = pneg %p97
      // Predicated region
      $region9: #{tpu_custom_call.1} parent=5 // pred_check
        _
      $region10: #{tpu_custom_call.1} parent=5 // pred_check_branch
        %100 = sbr.rel (%p97) target = $region12
      $region11: #{tpu_custom_call.1} parent=5 // pred_region
        %s101 = ssub.s32 %s14, 1
        // Predicated region
        $region13: #{tpu_custom_call.1} parent=11 // pred_check
          %p102 = pneg %p61
        $region14: #{tpu_custom_call.1} parent=11 // pred_check_branch
          %104 = sbr.rel (%p102) target = $region16
        $region15: #{tpu_custom_call.1} parent=11 // pred_region
          _
        $region16: #{tpu_custom_call.1} parent=11 // pred_fallthru
          _
      $region12: #{tpu_custom_call.1} parent=5 // pred_fallthru
        _
      %p105 = scmp.lt.s32.totalorder %s14, 2
      // Predicated region
      $region17: #{tpu_custom_call.1} parent=5 // pred_check
        %p106 = pneg %p105
      $region18: #{tpu_custom_call.1} parent=5 // pred_check_branch
        %108 = sbr.rel (%p106) target = $region20
      $region19: #{tpu_custom_call.1} parent=5 // pred_region
        // Predicated region
        $region21: #{tpu_custom_call.1} parent=19 // pred_check
          %p109 = pneg %p34
        $region22: #{tpu_custom_call.1} parent=19 // pred_check_branch
          %111 = sbr.rel (%p109) target = $region24
        $region23: #{tpu_custom_call.1} parent=19 // pred_region
          %s112 = sand.u32 %s24, 1
          %s113 = scalar_lea.sflag [#allocation3], %s112
          %s114 = sand.u32 %s24, 1
          %s115 = smul.addr %s114, 8
          %s116 = scalar_lea.vmem [#allocation2], %s115
          %s118 = ssub.s32 128, 128
          %119 = vsyncadd %s113, %s118
          %s120 = smul.addr %s14, 128
          %s121 = scalar_lea.hbm %s0, %s120
          %s123 = sshll.u32 %s116, 4
          %s124 = int_to_ptr.vmem [resolvable:$true] %s123
          %126 = dma.hbm_to_vmem [thread:$0]  %s121, 128, %s124, %s113
        $region24: #{tpu_custom_call.1} parent=19 // pred_fallthru
          _
      $region20: #{tpu_custom_call.1} parent=5 // pred_fallthru
        _
      %p127 = scmp.le.s32.totalorder 1, %s14
      %p128 = scmp.lt.s32.totalorder %s14, 3
      %p129 = pnand %p127, %p128
      %p130 = pneg %p129
      // Predicated region
      $region25: #{tpu_custom_call.1} parent=5 // pred_check
        _
      $region26: #{tpu_custom_call.1} parent=5 // pred_check_branch
        %132 = sbr.rel (%p129) target = $region28
      $region27: #{tpu_custom_call.1} parent=5 // pred_region
        %s133 = ssub.s32 %s14, 1
        %s134 = sand.u32 %s27, 1
        %s135 = scalar_lea.sflag [#allocation3], %s134
        %s136 = sand.u32 %s27, 1
        %s137 = smul.addr %s136, 8
        %s138 = scalar_lea.vmem [#allocation2], %s137
        // Predicated region
        $region29: #{tpu_custom_call.1} parent=27 // pred_check
          %p139 = pneg %p40
        $region30: #{tpu_custom_call.1} parent=27 // pred_check_branch
          %141 = sbr.rel (%p139) target = $region32
        $region31: #{tpu_custom_call.1} parent=27 // pred_region
          %142 = dma.done %s135, 128
        $region32: #{tpu_custom_call.1} parent=27 // pred_fallthru
          _
        %s143 = sand.u32 %s27, 1
        %s144 = scalar_lea.sflag [#allocation3], %s143
        %s145 = sand.u32 %s27, 1
        %s146 = smul.addr %s145, 8
        %s147 = scalar_lea.vmem [#allocation2], %s146
        %p148 = pneg %p40
        %p149 = pneg %p37
        %p150 = pneg %p61
        %p151 = pneg %p58
        %p152 = pneg %p87
        %p153 = pneg %p84
        %s154 = sand.u32 %s74, 1
        %s155 = scalar_lea.sflag [#allocation4], %s154
        %s156 = sand.u32 %s74, 1
        %s157 = scalar_lea.vmem [#allocation5], %s156
        %v158 = vld [vmem:[%s1] sm:$0x1]
        %v159 = vld [vmem:[%s138] sm:$0xff]
        %v161 = vlaneseq
        %v162 = vshrl.u32 %v161, 7
        %v163 = vsub.s32 0, %v162
        %v164 = vrot.slane %v158, %v163
        %v166 = vmul.f32 %v159, %v164
        %vm167 = vcmask 261120
        %v168 = vsel %vm167, %v166, 0.0
        %169 = vadd.xlane.f32.xlu0 %v168
        %v170 = vpop.xlane.xlu0 %169
        %v171 = vrot.slane %v170, 4
        %v172 = vmax.f32 %v170, %v171
        %v173 = vrot.slane %v172, 2
        %v174 = vmax.f32 %v172, %v173
        %v175 = vrot.slane %v174, 1
        %v176 = vmax.f32 %v174, %v175
        %v177 = vsub.f32 %v170, %v176
        %v178 = vmul.f32 %v177, 1.442695
        %v179 = vpow.pop %v178
        %v180 = vrot.slane %v179, 4
        %v181 = vadd.f32 %v179, %v180
        %v182 = vrot.slane %v181, 2
        %v183 = vadd.f32 %v181, %v182
        %v184 = vrot.slane %v183, 1
        %v185 = vadd.f32 %v183, %v184
        %v186 = vrcp.pop %v185
        %v187 = vmul.f32 %v185, %v186
        %v188 = vsub.f32 2.0, %v187
        %v189 = vmul.f32 %v186, %v188
        %v190 = vmul.f32 %v179, %v189
        %v191 = vmul.f32 %v159, %v190
        %v192 = vsel %vm167, %v191, 0.0
        %v193 = vrot.slane %v192, 4
        %v194 = vadd.f32 %v192, %v193
        %v195 = vrot.slane %v194, 2
        %v196 = vadd.f32 %v194, %v195
        %v197 = vrot.slane %v196, 1
        %v198 = vadd.f32 %v196, %v197
        %vm199 = vcmask 253952
        %200 = vst.msk [vmem:[%s157] sm:$0x1] %vm199, %v198
        %s201 = sand.u32 %s74, 1
        %s202 = scalar_lea.sflag [#allocation4], %s201
        %s203 = sand.u32 %s74, 1
        %s204 = scalar_lea.vmem [#allocation5], %s203
        // Predicated region
        $region33: #{tpu_custom_call.1} parent=27 // pred_check
          %p205 = pneg %p84
        $region34: #{tpu_custom_call.1} parent=27 // pred_check_branch
          %207 = sbr.rel (%p205) target = $region36
        $region35: #{tpu_custom_call.1} parent=27 // pred_region
          %s209 = ssub.s32 16, 16
          %210 = vsyncadd %s202, %s209
          %s211 = smul.addr %s19, 16
          %s212 = scalar_lea.hbm %s2, %s211
          %s214 = sshll.u32 %s204, 4
          %s215 = int_to_ptr.vmem [resolvable:$true] %s214
          %217 = dma.vmem_to_hbm [thread:$0]  %s215, 16, %s212, %s202
        $region36: #{tpu_custom_call.1} parent=27 // pred_fallthru
          _
      $region28: #{tpu_custom_call.1} parent=5 // pred_fallthru
        _
      %p218 = scmp.le.s32.totalorder 2, %s14
      // Predicated region
      $region37: #{tpu_custom_call.1} parent=5 // pred_check
        %p219 = pneg %p218
      $region38: #{tpu_custom_call.1} parent=5 // pred_check_branch
        %221 = sbr.rel (%p219) target = $region40
      $region39: #{tpu_custom_call.1} parent=5 // pred_region
        %s222 = ssub.s32 %s14, 2
        // Predicated region
        $region41: #{tpu_custom_call.1} parent=39 // pred_check
          %p223 = pneg %p90
        $region42: #{tpu_custom_call.1} parent=39 // pred_check_branch
          %225 = sbr.rel (%p223) target = $region44
        $region43: #{tpu_custom_call.1} parent=39 // pred_region
          %s226 = sand.u32 %s75, 1
          %s227 = scalar_lea.sflag [#allocation4], %s226
          %s228 = sand.u32 %s75, 1
          %s229 = scalar_lea.vmem [#allocation5], %s228
          %230 = dma.done %s227, 16
        $region44: #{tpu_custom_call.1} parent=39 // pred_fallthru
          _
      $region40: #{tpu_custom_call.1} parent=5 // pred_fallthru
        _
    $region6: #{tpu_custom_call.1} parent=1 // loop_footer
      %s18 = sadd.s32 1, %s14
    $region7: #{tpu_custom_call.1} parent=1 // loop_footer_branch
      %13 = sbr.rel target = $region3
    $region8: #{tpu_custom_call.1} parent=1 // loop_exit
      _
    %231 = vsyncpa [#allocation3], 1
    %s232 = scalar_lea.sflag [#allocation3], 1
    %233 = vsyncpa %s232, 1
    %234 = vsyncpa [#allocation4], 1
    %s235 = scalar_lea.sflag [#allocation4], 1
    %236 = vsyncpa %s235, 1

</llo_original>
